<compile_context>
chip_gen: v5e
topology: v5e:2x2
jax: 0.10.0
libtpu: 0.0.40
codegen_flags: <defaults>
</compile_context>

<pallas_src>
import jax
import jax.numpy as jnp
from jax.experimental import pallas as pl
from jax.experimental.pallas import tpu as pltpu

_LANES = 128  # full vreg lane width -> unmasked, lane-dense vld/vst


def _round_up(x, m):
    return ((x + m - 1) // m) * m


def _row_tile():
    """Row-tile (block = tile_r x 128 f32).  2 MiB blocks by default
    (v5e/v6e sweet spot, 8 MiB double-buffered); 4 MiB blocks on v7x."""
    try:
        kind = jax.devices()[0].device_kind.lower()
    except Exception:
        kind = ""
    if "v7" in kind:
        return 8192  # 4 MiB block; 16 MiB double-buffered < 32 MiB scoped VMEM
    return 4096      # 2 MiB block; 8 MiB double-buffered < 16 MiB scoped VMEM (v5e)


def _scale_shift_kernel(w_ref, b_ref, x_ref, o_ref):
    # w_ref, b_ref: (1,) scalars in SMEM.  x_ref, o_ref: (tile_r, 128) in VMEM.
    w = w_ref[0]
    b = b_ref[0]
    o_ref[...] = x_ref[...] * w + b  # one vmul + vadd per vreg on the VPU


def _run_slab(x_slab, weight_flat, bias):
    """y = x * w + b on a lane-dense (rows, 128) f32 slab."""
    rows = x_slab.shape[0]
    # Sublane-aligned tile; ragged last grid block is masked by Pallas, so
    # padding never depends on the tile size.
    tile_r = min(_row_tile(), _round_up(rows, 8))
    grid = (pl.cdiv(rows, tile_r),)
    return pl.pallas_call(
        _scale_shift_kernel,
        out_shape=jax.ShapeDtypeStruct((rows, _LANES), jnp.float32),
        grid=grid,
        in_specs=[
            pl.BlockSpec(memory_space=pltpu.MemorySpace.SMEM),   # weight (1,)
            pl.BlockSpec(memory_space=pltpu.MemorySpace.SMEM),   # bias   (1,)
            pl.BlockSpec((tile_r, _LANES), lambda i: (i, 0)),    # x slab tile
        ],
        out_specs=pl.BlockSpec((tile_r, _LANES), lambda i: (i, 0)),
        compiler_params=pltpu.CompilerParams(
            dimension_semantics=("parallel",),  # independent tiles (megacore-safe)
        ),
    )(weight_flat, bias, x_slab)


def linear_forward(x, weight, bias):
    """Forward of torch.nn.Linear(1, 1): x (N, 1) f32 -> y (N, 1) f32."""
    n, in_f = x.shape
    out_f, in_f_w = weight.shape
    assert in_f == 1 and in_f_w == 1 and out_f == 1 and bias.shape == (1,)
    assert x.dtype == jnp.float32, "kernel tiling/byte budget assumes float32 input"
    assert weight.dtype == jnp.float32 and bias.dtype == jnp.float32

    w_flat = weight.reshape(1)
    x_flat = x.reshape(-1)
    n_main = (n // _LANES) * _LANES

    if n_main == n and n > 0:
        # Fast path: contiguous (N,1) -> (N/128, 128) is a free reshape.
        # No pad, no slice: ideal 2*N*4B HBM traffic.
        y_slab = _run_slab(x_flat.reshape(n // _LANES, _LANES), w_flat, bias)
        return y_slab.reshape(n, out_f)

    if n_main == 0:
        # Tiny input (< 128 elements): pad a single (8, 128) block (<4 KiB),
        # run the kernel once, strip the padding.
        x_slab = jnp.pad(x_flat, (0, 8 * _LANES - n)).reshape(8, _LANES)
        y_slab = _run_slab(x_slab, w_flat, bias)
        return y_slab.reshape(-1)[:n].reshape(n, out_f)

    # Ragged large input: kernel on the 128-aligned prefix; finish the
    # <=127-element tail with one plain-jnp FMA (cheaper than re-padding /
    # copying the whole array).
    y_main = _run_slab(x_flat[:n_main].reshape(-1, _LANES), w_flat, bias).reshape(-1)
    y_tail = x_flat[n_main:] * w_flat[0] + bias[0]
    return jnp.concatenate([y_main, y_tail]).reshape(n, out_f)


if __name__ == "__main__":
    key = jax.random.PRNGKey(0)
    kx, kw, kb, kx2, kx3 = jax.random.split(key, 5)

    # Deterministic parameter init mimicking torch.nn.Linear(1, 1)'s
    # U(-1/sqrt(in_features), 1/sqrt(in_features)) = U(-1, 1).
    weight = jax.random.uniform(kw, (1, 1), minval=-1.0, maxval=1.0, dtype=jnp.float32)
    bias = jax.random.uniform(kb, (1,), minval=-1.0, maxval=1.0, dtype=jnp.float32)

    # Small batch consistent with the module: N=8, in_features=1 (single-block path).
    x_small = jax.random.normal(kx, (8, 1), dtype=jnp.float32)
    # 128-aligned batch -> fast path (pure reshape, no pad / no output slice).
    x_fast = jax.random.normal(kx2, (512, 1), dtype=jnp.float32)
    # Ragged batch -> kernel on the aligned 256-prefix, jnp FMA on the 44-tail.
    x_ragged = jax.random.normal(kx3, (300, 1), dtype=jnp.float32)

    for x in (x_small, x_fast, x_ragged):
        y = linear_forward(x, weight, bias)
        jax.block_until_ready(y)
        y_ref = x @ weight.T + bias
        assert y.shape == x.shape, f"shape mismatch at N={x.shape[0]}"
        assert jnp.allclose(y, y_ref, atol=1e-6), f"value mismatch at N={x.shape[0]}"

    print("KERNEL_OK")
</pallas_src>

<mosaic_0001>
module attributes {stable_mosaic.version = 11 : i64} {
  func.func @_scale_shift_kernel(%arg0: i32, %arg1: memref<1xf32, #tpu.memory_space<smem>>, %arg2: memref<1xf32, #tpu.memory_space<smem>>, %arg3: memref<8x128xf32, #tpu.memory_space<vmem>>, %arg4: memref<8x128xf32, #tpu.memory_space<vmem>>) attributes {dimension_semantics = [#tpu.dimension_semantics<parallel>], iteration_bounds = array<i64: 1>, scalar_prefetch = 0 : i64, scratch_operands = 0 : i64, tpu.core_type = #tpu.core_type<tc>, window_params = [{transform_indices = @transform_0, window_bounds = array<i64: 1>}, {transform_indices = @transform_1, window_bounds = array<i64: 1>}, {transform_indices = @transform_2, window_bounds = array<i64: 8, 128>}, {transform_indices = @transform_3, window_bounds = array<i64: 8, 128>}]} {
    %c0 = arith.constant 0 : index
    %0 = memref.load %arg1[%c0] : memref<1xf32, #tpu.memory_space<smem>>
    %c0_0 = arith.constant 0 : index
    %1 = memref.load %arg2[%c0_0] : memref<1xf32, #tpu.memory_space<smem>>
    %c0_1 = arith.constant 0 : index
    %c0_2 = arith.constant 0 : index
    %2 = vector.load %arg3[%c0_1, %c0_2] : memref<8x128xf32, #tpu.memory_space<vmem>>, vector<8x128xf32>
    %3 = vector.broadcast %0 : f32 to vector<8x128xf32>
    %4 = arith.mulf %2, %3 : vector<8x128xf32>
    %5 = vector.broadcast %1 : f32 to vector<8x128xf32>
    %6 = arith.addf %4, %5 : vector<8x128xf32>
    %c0_3 = arith.constant 0 : index
    %c0_4 = arith.constant 0 : index
    %7 = vector.load %arg4[%c0_3, %c0_4] : memref<8x128xf32, #tpu.memory_space<vmem>>, vector<8x128xf32>
    tpu.vector_store %arg4[%c0_3, %c0_4], %6 {strides = array<i32>} : memref<8x128xf32, #tpu.memory_space<vmem>>, vector<8x128xf32>,
    return
  }
  func.func @transform_0(%arg0: i32) -> i32 {
    %c0_i32 = arith.constant 0 : i32
    %c0_i32_0 = arith.constant 0 : i32
    return %c0_i32 : i32
  }
  func.func @transform_1(%arg0: i32) -> i32 {
    %c0_i32 = arith.constant 0 : i32
    %c0_i32_0 = arith.constant 0 : i32
    return %c0_i32 : i32
  }
  func.func @transform_2(%arg0: i32) -> (i32, i32) {
    %c0_i32 = arith.constant 0 : i32
    %c0_i32_0 = arith.constant 0 : i32
    return %arg0, %c0_i32 : i32, i32
  }
  func.func @transform_3(%arg0: i32) -> (i32, i32) {
    %c0_i32 = arith.constant 0 : i32
    %c0_i32_0 = arith.constant 0 : i32
    return %arg0, %c0_i32 : i32, i32
  }
}

</mosaic_0001>

<llo_original>
// kernel: tpu_custom_call.1
$region0: #{tpu_custom_call.1}
  #allocation0 [shape = 'u32[]', space=smem, size = 0x4, offset = 0x4, fixed_abs, tag = 'smem constant byte address 0x4 - core index']
  #allocation1 [shape = 'u32[72,128]{1,0:T(1,128)}', space=vmem, size = 0x9000, scoped, tag = 'internal scratch']
  #allocation2 [shape = 'f32[1]{0:T(128)S(6)}', space=smem, size = 0x200, scoped, tag = 'scoped memory for tpu_custom_call.1']
  #allocation3 [shape = 'f32[1]{0:T(128)S(6)}', space=smem, size = 0x200, scoped, tag = 'scoped memory for tpu_custom_call.1']
  %s0 = inlined_call_operand.<no memory space> [shape: f32[1], index: 0, kind: input, shape index: {}]
  %s1 = inlined_call_operand.<no memory space> [shape: f32[1], index: 1, kind: input, shape index: {}]
  %s2 = inlined_call_operand.hbm [shape: f32[8,128], index: 2, kind: input, shape index: {}]
  %s3 = inlined_call_operand.hbm [shape: f32[8,128], index: 3, kind: output, shape index: {}]
  %s4 = sld [smem:[#allocation0]]
  $region26: #{tpu_custom_call.1} parent=0
    _
  %s6 = ssub.s32 1, %s4
  %s7 = scalar_select 0, %s6, %s4
  %8 = sst [smem:[#allocation2]] %s0
  %9 = sst [smem:[#allocation3]] %s1
  $region1: #{tpu_custom_call.1} parent=0
    #allocation4 [shape = 'u8[4096]{0}', space=vmem, size = 0x1000, scoped, tag = 'input window, operand 2, single buffered']
    #allocation5 [shape = 's32[1]{0}', space=sflag, size = 0x4, scoped, tag = 'scoped memory for tpu_custom_call.1']
    #allocation6 [shape = 's32[1]{0}', space=sflag, size = 0x4, scoped, tag = 'scoped memory for tpu_custom_call.1']
    #allocation7 [shape = 'u8[4096]{0}', space=vmem, size = 0x1000, scoped, tag = 'output window, operand 0, single buffered']
    %10 = vsyncpa [#allocation5], 0
    %11 = vsyncpa [#allocation6], 0
    // Predicated region
    $region2: #{tpu_custom_call.1} parent=1 // pred_check
      _
    $region3: #{tpu_custom_call.1} parent=1 // pred_check_branch
      %13 = sbr.rel (0) target = $region5
    $region4: #{tpu_custom_call.1} parent=1 // pred_region
      _
    $region5: #{tpu_custom_call.1} parent=1 // pred_fallthru
      _
    // Predicated region
    $region6: #{tpu_custom_call.1} parent=1 // pred_check
      _
    $region7: #{tpu_custom_call.1} parent=1 // pred_check_branch
      %15 = sbr.rel (0) target = $region9
    $region8: #{tpu_custom_call.1} parent=1 // pred_region
      _
    $region9: #{tpu_custom_call.1} parent=1 // pred_fallthru
      _
    // Predicated region
    $region10: #{tpu_custom_call.1} parent=1 // pred_check
      _
    $region11: #{tpu_custom_call.1} parent=1 // pred_check_branch
      %17 = sbr.rel (0) target = $region13
    $region12: #{tpu_custom_call.1} parent=1 // pred_region
      %19 = vsyncadd [#allocation5], 0
      %s21 = sshll.u32 %s2, 4
      %s22 = int_to_ptr.hbm [resolvable:$true] %s21
      %s23 = sshll.u32 [#allocation4], 4
      %s24 = int_to_ptr.vmem [resolvable:$true] %s23
      %26 = dma.hbm_to_vmem [thread:$0]  %s22, 128, %s24, [#allocation5]
    $region13: #{tpu_custom_call.1} parent=1 // pred_fallthru
      _
    // Predicated region
    $region14: #{tpu_custom_call.1} parent=1 // pred_check
      _
    $region15: #{tpu_custom_call.1} parent=1 // pred_check_branch
      %28 = sbr.rel (0) target = $region17
    $region16: #{tpu_custom_call.1} parent=1 // pred_region
      %30 = dma.done [#allocation5], 128
    $region17: #{tpu_custom_call.1} parent=1 // pred_fallthru
      _
    %s31 = sld [smem:[#allocation2]]
    %s32 = sld [smem:[#allocation3]]
    %v33 = vld [vmem:[#allocation4] sm:$0xff]
    %v34 = vstv %s31
    %v35 = vmul.f32 %v33, %v34
    %v36 = vstv %s32
    %v37 = vadd.f32 %v35, %v36
    %38 = vst [vmem:[#allocation7] sm:$0xff] %v37
    // Predicated region
    $region18: #{tpu_custom_call.1} parent=1 // pred_check
      _
    $region19: #{tpu_custom_call.1} parent=1 // pred_check_branch
      %40 = sbr.rel (0) target = $region21
    $region20: #{tpu_custom_call.1} parent=1 // pred_region
      %42 = vsyncadd [#allocation6], 0
      %s44 = sshll.u32 [#allocation7], 4
      %s45 = int_to_ptr.vmem [resolvable:$true] %s44
      %s46 = sshll.u32 %s3, 4
      %s47 = int_to_ptr.hbm [resolvable:$true] %s46
      %49 = dma.vmem_to_hbm [thread:$0]  %s45, 128, %s47, [#allocation6]
    $region21: #{tpu_custom_call.1} parent=1 // pred_fallthru
      _
    // Predicated region
    $region22: #{tpu_custom_call.1} parent=1 // pred_check
      _
    $region23: #{tpu_custom_call.1} parent=1 // pred_check_branch
      %51 = sbr.rel (0) target = $region25
    $region24: #{tpu_custom_call.1} parent=1 // pred_region
      %53 = dma.done [#allocation6], 128
    $region25: #{tpu_custom_call.1} parent=1 // pred_fallthru
      _
    %54 = vsyncpa [#allocation5], 1
    %55 = vsyncpa [#allocation6], 1

</llo_original>
